<compile_context>
chip_gen: v7x
topology: tpu7x:2x2x1
jax: 0.10.0
libtpu: 0.0.40
codegen_flags: <defaults>
</compile_context>

<pallas_src>
import jax
import jax.numpy as jnp
import numpy as np
from jax import lax
from jax.experimental import pallas as pl
from jax.experimental.pallas import tpu as pltpu


def _nearest_src_idx_np(out_size: int, in_size: int) -> np.ndarray:
    # PyTorch F.interpolate(mode='nearest'): src = floor(dst * in / out).
    # (Intentionally NOT mode='nearest-exact'.)
    return (np.arange(out_size, dtype=np.int64) * in_size) // out_size


def _runs_from_src(src: np.ndarray, in_size: int):
    """Contiguous output ranges per input index: list of (in_idx, out_lo, count).

    Valid because floor(dst*in/out) is non-decreasing in dst, so all outputs
    mapping to a given input index form one contiguous run.
    """
    runs = []
    for i in range(in_size):
        idx = np.nonzero(src == i)[0]
        if idx.size:
            runs.append((int(i), int(idx[0]), int(idx.size)))
    return runs


def _vmem_budget_bytes():
    """Generation-aware working-set budget and scoped VMEM limit."""
    try:
        cap = int(pltpu.get_tpu_info().vmem_capacity_bytes)
    except Exception:
        cap = 64 * 1024 * 1024  # conservative (v7x-sized) fallback
    budget = int(cap * 0.55)    # target working set; leave compiler headroom
    limit = int(cap * 0.75)     # scoped VMEM limit handed to the compiler
    budget = min(max(budget, 16 * 1024 * 1024), 96 * 1024 * 1024)
    limit = min(max(limit, 32 * 1024 * 1024), 112 * 1024 * 1024)
    return budget, limit


def _choose_row_tile(nc, per_row_bytes, fixed_bytes, budget_bytes):
    """Tile of the fused N*C axis.

    Fits the VMEM budget, keeps >= 4 grid steps when possible (2 pipeline
    stages x 2 TensorCores on v7x), prefers a divisor of nc, and falls back to
    padding (rather than TB=1) when nc has awkward factors.
    Returns (tile, pad_rows).
    """
    cap = max(1, int((budget_bytes - fixed_bytes) // max(per_row_bytes, 1)))
    if nc >= 8:
        min_grid = 4
    elif nc >= 2:
        min_grid = 2
    else:
        min_grid = 1
    cap = min(cap, max(1, nc // min_grid))
    tb = max(1, min(nc, cap))
    div = tb
    while nc % div != 0:
        div -= 1
    if div * 2 >= tb:      # divisor is close enough -> no padding needed
        return div, 0
    pad = (-nc) % tb
    return tb, pad


def upsample_nearest_3d(x: jnp.ndarray, output_size) -> jnp.ndarray:
    """Nearest-neighbor upsampling of a 5D NCDHW tensor to `output_size` = (D,H,W)."""
    N, C, D_in, H_in, W_in = x.shape
    D_out, H_out, W_out = (int(s) for s in output_size)
    NC = N * C

    d_src = _nearest_src_idx_np(D_out, D_in)
    h_src = _nearest_src_idx_np(H_out, H_in)
    w_src = _nearest_src_idx_np(W_out, W_in)

    out_dtype = x.dtype
    if jnp.issubdtype(x.dtype, jnp.floating):
        compute_dtype = x.dtype  # one-hot gather is exact; keep bf16 as bf16
    else:
        # TODO(synk): integer label volumes go through an f32 one-hot matmul;
        # exact only for |v| < 2^24 — large-magnitude labels would need a pure
        # copy/replication path.
        compute_dtype = jnp.float32
    item = jnp.dtype(out_dtype).itemsize
    citem = jnp.dtype(compute_dtype).itemsize

    # W-only one-hot gather matrix (W_in x W_out): orders of magnitude smaller
    # than the fused (H*W x H*W) matrix; handles arbitrary (non-integer) W ratios.
    gw_np = np.zeros((W_in, W_out), dtype=np.float32)
    gw_np[w_src, np.arange(W_out)] = 1.0
    gw = jnp.asarray(gw_np, dtype=compute_dtype)

    # H / D replication structure (static, known at trace time).
    h_is_int = (H_out % H_in) == 0
    d_is_int = (D_out % D_in) == 0
    sh = H_out // H_in if h_is_int else 0
    sd = D_out // D_in if d_is_int else 0
    h_runs = _runs_from_src(h_src, H_in)   # used only in the general-H path
    d_runs = _runs_from_src(d_src, D_in)   # used only in the general-D path

    # VMEM accounting per fused-N*C row: double-buffered in/out blocks plus the
    # single-buffered compute intermediates (post-matmul, post-H, post-D).
    in_row = D_in * H_in * W_in * item
    out_row = D_out * H_out * W_out * item
    interm = (D_in * H_in * W_out + D_in * H_out * W_out
              + D_out * H_out * W_out) * citem
    per_row_bytes = 2 * in_row + 2 * out_row + interm
    # gw is grid-invariant and tiny; charge both pipeline buffers + slack.
    fixed_bytes = 2 * W_in * W_out * citem + (1 << 20)

    budget, vmem_limit = _vmem_budget_bytes()
    TB, pad = _choose_row_tile(NC, per_row_bytes, fixed_bytes, budget)
    NCp = NC + pad

    x_flat = x.reshape(NC, D_in, H_in, W_in)
    if pad:
        x_flat = jnp.pad(x_flat, ((0, pad), (0, 0), (0, 0), (0, 0)))

    def kernel(x_ref, g_ref, o_ref):
        xs = x_ref[...]                                           # (TB, D_in, H_in, W_in)
        gmat = g_ref[...]                                         # (W_in, W_out)
        xw = xs.reshape(TB * D_in * H_in, W_in).astype(compute_dtype)
        # One fused matmul: M = TB*D_in*H_in keeps the MXU busy, exact gather.
        y = jnp.dot(xw, gmat, preferred_element_type=compute_dtype)  # (M, W_out)

        # --- H replication (each source row -> contiguous output rows) ---
        if h_is_int:
            y = lax.broadcast_in_dim(y, (TB * D_in * H_in, sh, W_out), (0, 2))
            y = y.reshape(TB, D_in, H_out, W_out)
        else:
            y = y.reshape(TB * D_in, H_in, W_out)
            parts = [
                lax.broadcast_in_dim(y[:, hi, :], (TB * D_in, cnt, W_out), (0, 2))
                for hi, _, cnt in h_runs
            ]
            y = jnp.concatenate(parts, axis=1).reshape(TB, D_in, H_out, W_out)

        # --- D replication: dense stores over contiguous output-depth ranges ---
        if d_is_int:
            z = lax.broadcast_in_dim(y, (TB, D_in, sd, H_out, W_out), (0, 1, 3, 4))
            o_ref[...] = z.reshape(TB, D_out, H_out, W_out).astype(o_ref.dtype)
        else:
            for di, lo, cnt in d_runs:
                o_ref[:, lo:lo + cnt] = jnp.broadcast_to(
                    y[:, di:di + 1], (TB, cnt, H_out, W_out)).astype(o_ref.dtype)

    flops = 2 * NCp * D_in * H_in * W_in * W_out      # the W-gather matmul only
    bytes_accessed = (NCp * D_in * H_in * W_in * item
                      + NCp * D_out * H_out * W_out * item
                      + W_in * W_out * citem)

    out = pl.pallas_call(
        kernel,
        out_shape=jax.ShapeDtypeStruct((NCp, D_out, H_out, W_out), out_dtype),
        grid=(NCp // TB,),
        in_specs=[
            pl.BlockSpec((TB, D_in, H_in, W_in), lambda i: (i, 0, 0, 0)),
            pl.BlockSpec((W_in, W_out), lambda i: (0, 0)),   # grid-invariant, tiny
        ],
        # W_out stays on the lane axis (H on sublanes); for realistic plantseg
        # volumes W_out >= 128 so stores are lane-dense.
        out_specs=pl.BlockSpec((TB, D_out, H_out, W_out), lambda i: (i, 0, 0, 0)),
        compiler_params=pltpu.CompilerParams(
            dimension_semantics=("parallel",),
            vmem_limit_bytes=vmem_limit,
        ),
        cost_estimate=pl.CostEstimate(
            flops=flops, transcendentals=0, bytes_accessed=bytes_accessed),
    )(x_flat, gw)

    if pad:
        out = out[:NC]
    return out.reshape(N, C, D_out, H_out, W_out)


class AbstractUpsampling:
    """Mirror of the PyTorch module: forward derives output_size from encoder_features."""

    def __init__(self, upsample):
        self.upsample = upsample

    def __call__(self, encoder_features, x):
        output_size = encoder_features.shape[2:]
        return self.upsample(x, output_size)


def _reference_nearest_3d(x, output_size):
    # Pure-jnp reference with PyTorch 'nearest' index semantics.
    D_out, H_out, W_out = output_size
    _, _, D_in, H_in, W_in = x.shape
    d = _nearest_src_idx_np(D_out, D_in)
    h = _nearest_src_idx_np(H_out, H_in)
    w = _nearest_src_idx_np(W_out, W_in)
    return x[:, :, d][:, :, :, h][:, :, :, :, w]


if __name__ == "__main__":
    key = jax.random.PRNGKey(0)
    k1, k2 = jax.random.split(key)

    # x: (N, C, D_in, H_in, W_in) ; encoder_features: (N, C, D_out, H_out, W_out)
    x = jax.random.normal(k1, (2, 4, 4, 8, 8), dtype=jnp.float32)
    encoder_features = jax.random.normal(k2, (2, 4, 8, 16, 16), dtype=jnp.float32)

    model = AbstractUpsampling(upsample=upsample_nearest_3d)
    out = model(encoder_features, x)
    out = jax.block_until_ready(out)

    ref = _reference_nearest_3d(x, encoder_features.shape[2:])
    assert out.shape == encoder_features.shape
    assert jnp.allclose(out, ref, atol=1e-6), "mismatch vs reference nearest upsample"

    print("KERNEL_OK")
</pallas_src>

<mosaic_0001>
module attributes {stable_mosaic.version = 11 : i64} {
  func.func @kernel(%arg0: i32, %arg1: memref<2x4x8x8xf32, #tpu.memory_space<vmem>>, %arg2: memref<8x16xf32, #tpu.memory_space<vmem>>, %arg3: memref<2x8x16x16xf32, #tpu.memory_space<vmem>>) attributes {dimension_semantics = [#tpu.dimension_semantics<parallel>], iteration_bounds = array<i64: 4>, scalar_prefetch = 0 : i64, scratch_operands = 0 : i64, tpu.core_type = #tpu.core_type<tc>, window_params = [{transform_indices = @transform_0, window_bounds = array<i64: 2, 4, 8, 8>}, {pipeline_mode = #tpu.pipeline_mode<synchronous>, transform_indices = @transform_1, window_bounds = array<i64: 8, 16>}, {transform_indices = @transform_2, window_bounds = array<i64: 2, 8, 16, 16>}]} {
    %c0 = arith.constant 0 : index
    %c0_0 = arith.constant 0 : index
    %c0_1 = arith.constant 0 : index
    %c0_2 = arith.constant 0 : index
    %0 = vector.load %arg1[%c0, %c0_0, %c0_1, %c0_2] : memref<2x4x8x8xf32, #tpu.memory_space<vmem>>, vector<2x4x8x8xf32>
    %c0_3 = arith.constant 0 : index
    %c0_4 = arith.constant 0 : index
    %1 = vector.load %arg2[%c0_3, %c0_4] : memref<8x16xf32, #tpu.memory_space<vmem>>, vector<8x16xf32>
    %2 = vector.shape_cast %0 : vector<2x4x8x8xf32> to vector<64x8xf32>
    %cst = arith.constant dense<0.000000e+00> : vector<64x16xf32>
    %3 = tpu.matmul %2, %1, %cst {dimension_numbers = #tpu.dot_dimension_numbers<[1], [0], [0], [1], [0, 0, 1, 1], [], []>} : vector<64x8xf32>, vector<8x16xf32>, vector<64x16xf32> -> vector<64x16xf32>
    %4 = vector.shape_cast %3 : vector<64x16xf32> to vector<64x1x16xf32>
    %5 = vector.broadcast %4 : vector<64x1x16xf32> to vector<64x2x16xf32>
    %6 = vector.shape_cast %5 : vector<64x2x16xf32> to vector<2x4x16x16xf32>
    %7 = vector.shape_cast %6 : vector<2x4x16x16xf32> to vector<2x4x1x16x16xf32>
    %8 = vector.broadcast %7 : vector<2x4x1x16x16xf32> to vector<2x4x2x16x16xf32>
    %9 = vector.shape_cast %8 : vector<2x4x2x16x16xf32> to vector<2x8x16x16xf32>
    %c0_5 = arith.constant 0 : index
    %c0_6 = arith.constant 0 : index
    %c0_7 = arith.constant 0 : index
    %c0_8 = arith.constant 0 : index
    %10 = vector.load %arg3[%c0_5, %c0_6, %c0_7, %c0_8] : memref<2x8x16x16xf32, #tpu.memory_space<vmem>>, vector<2x8x16x16xf32>
    tpu.vector_store %arg3[%c0_5, %c0_6, %c0_7, %c0_8], %9 {strides = array<i32>} : memref<2x8x16x16xf32, #tpu.memory_space<vmem>>, vector<2x8x16x16xf32>,
    return
  }
  func.func @transform_0(%arg0: i32) -> (i32, i32, i32, i32) {
    %c0_i32 = arith.constant 0 : i32
    %c0_i32_0 = arith.constant 0 : i32
    %c0_i32_1 = arith.constant 0 : i32
    %c0_i32_2 = arith.constant 0 : i32
    return %arg0, %c0_i32, %c0_i32_0, %c0_i32_1 : i32, i32, i32, i32
  }
  func.func @transform_1(%arg0: i32) -> (i32, i32) {
    %c0_i32 = arith.constant 0 : i32
    %c0_i32_0 = arith.constant 0 : i32
    %c0_i32_1 = arith.constant 0 : i32
    return %c0_i32, %c0_i32_0 : i32, i32
  }
  func.func @transform_2(%arg0: i32) -> (i32, i32, i32, i32) {
    %c0_i32 = arith.constant 0 : i32
    %c0_i32_0 = arith.constant 0 : i32
    %c0_i32_1 = arith.constant 0 : i32
    %c0_i32_2 = arith.constant 0 : i32
    return %arg0, %c0_i32, %c0_i32_0, %c0_i32_1 : i32, i32, i32, i32
  }
}

</mosaic_0001>

<llo_original>
// kernel: tpu_custom_call.1
$region0: #{tpu_custom_call.1}
  #allocation0 [shape = 'u32[]', space=smem, size = 0x4, offset = 0x4, fixed_abs, tag = 'smem constant byte address 0x4 - core index']
  #allocation1 [shape = 'u32[144,128]{1,0:T(1,128)}', space=vmem, size = 0x12000, scoped, tag = 'internal scratch']
  %s0 = inlined_call_operand.hbm [shape: f32[8,4,8,8], index: 0, kind: input, shape index: {}]
  %s1 = inlined_call_operand.hbm [shape: f32[8,16], index: 1, kind: input, shape index: {}]
  %s2 = inlined_call_operand.hbm [shape: f32[8,8,16,16], index: 2, kind: output, shape index: {}]
  %s3 = sld [smem:[#allocation0]]
  $region49: #{tpu_custom_call.1} parent=0
    _
  %s5 = ssub.s32 1, %s3
  %s6 = scalar_select 0, %s5, %s3
  $region1: #{tpu_custom_call.1} parent=0
    #allocation2 [shape = 'u8[65536]{0}', space=vmem, size = 0x10000, scoped, tag = 'input window, operand 0']
    #allocation3 [shape = 's32[2]{0}', space=sflag, size = 0x8, scoped, tag = 'scoped memory for tpu_custom_call.1']
    #allocation4 [shape = 's32[2]{0}', space=sflag, size = 0x8, scoped, tag = 'scoped memory for tpu_custom_call.1']
    #allocation5 [shape = 'u8[4096]{0}', space=vmem, size = 0x1000, scoped, tag = 'input window, operand 1, single buffered']
    #allocation6 [shape = 's32[1]{0}', space=sflag, size = 0x4, scoped, tag = 'scoped memory for tpu_custom_call.1']
    #allocation7 [shape = 'u8[262144]{0}', space=vmem, size = 0x40000, scoped, tag = 'output window, operand 0']
    %7 = vsyncpa [#allocation3], 0
    %s8 = scalar_lea.sflag [#allocation3], 1
    %9 = vsyncpa %s8, 0
    %10 = vsyncpa [#allocation6], 0
    %11 = vsyncpa [#allocation4], 0
    %s12 = scalar_lea.sflag [#allocation4], 1
    %13 = vsyncpa %s12, 0
    loop: start=0, step=1, limit=6
    $region2: #{tpu_custom_call.1} parent=1 // loop_pre_header
      _
    $region3: #{tpu_custom_call.1} parent=1 // loop_header
      %s15 = sphi 0, %s19
      %p16 = scmp.ge.s32.totalorder %s15, 6
      %s25 = sphi 0, %s27
      %s28 = sphi 0, %s25
      %s29 = sphi 0, %s28
      %s45 = sphi 0, %s29
      %s49 = sphi 0, %s49
      %s51 = sphi 0, %s49
      %s52 = sphi 0, %s51
      %s66 = sphi 0, %s52
      %s72 = sphi 0, %s74
      %s75 = sphi 0, %s72
      %s76 = sphi 0, %s75
      %s92 = sphi 0, %s76
    $region4: #{tpu_custom_call.1} parent=1 // loop_header_branch
      %18 = sbr.rel (%p16) target = $region8
    $region5: #{tpu_custom_call.1} parent=1 // loop_body
      %s20 = ssub.s32 %s15, 1
      %s21 = ssub.s32 %s15, 2
      %s22 = sadd.s32 %s15, 1
      %s23 = ssub.s32 %s15, %s22
      %p24 = scmp.eq.s32.totalorder %s23, 0
      %s26 = sadd.s32 %s25, 1
      %s27 = scalar_select %p24, %s25, %s26
      %p30 = pneg %p24
      %p31 = scmp.eq.s32.totalorder %s15, 3
      %p32 = por %p30, %p31
      %p33 = scmp.ne.s32.totalorder %s25, %s28
      %p34 = scmp.eq.s32.totalorder %s15, 0
      %p35 = por %p33, %p34
      %p36 = scmp.ne.s32.totalorder %s25, %s28
      %p37 = scmp.eq.s32.totalorder %s20, 3
      %p38 = por %p36, %p37
      %p39 = scmp.ne.s32.totalorder %s28, %s29
      %p40 = scmp.eq.s32.totalorder %s20, 0
      %p41 = por %p39, %p40
      %p42 = scmp.ne.s32.totalorder %s28, %s29
      %p43 = scmp.eq.s32.totalorder %s21, 3
      %p44 = por %p42, %p43
      %p46 = scmp.ne.s32.totalorder %s29, %s45
      %p47 = scmp.eq.s32.totalorder %s21, 0
      %p48 = por %p46, %p47
      %s50 = sadd.s32 %s49, 1
      %p53 = scmp.eq.s32.totalorder %s15, 3
      %p54 = scmp.ne.s32.totalorder %s49, %s51
      %p55 = scmp.eq.s32.totalorder %s15, 0
      %p56 = por %p54, %p55
      %p57 = scmp.ne.s32.totalorder %s49, %s51
      %p58 = scmp.eq.s32.totalorder %s20, 3
      %p59 = por %p57, %p58
      %p60 = scmp.ne.s32.totalorder %s51, %s52
      %p61 = scmp.eq.s32.totalorder %s20, 0
      %p62 = por %p60, %p61
      %p63 = scmp.ne.s32.totalorder %s51, %s52
      %p64 = scmp.eq.s32.totalorder %s21, 3
      %p65 = por %p63, %p64
      %p67 = scmp.ne.s32.totalorder %s52, %s66
      %p68 = scmp.eq.s32.totalorder %s21, 0
      %p69 = por %p67, %p68
      %s70 = ssub.s32 %s15, %s22
      %p71 = scmp.eq.s32.totalorder %s70, 0
      %s73 = sadd.s32 %s72, 1
      %s74 = scalar_select %p71, %s72, %s73
      %p77 = pneg %p71
      %p78 = scmp.eq.s32.totalorder %s15, 3
      %p79 = por %p77, %p78
      %p80 = scmp.ne.s32.totalorder %s72, %s75
      %p81 = scmp.eq.s32.totalorder %s15, 0
      %p82 = por %p80, %p81
      %p83 = scmp.ne.s32.totalorder %s72, %s75
      %p84 = scmp.eq.s32.totalorder %s20, 3
      %p85 = por %p83, %p84
      %p86 = scmp.ne.s32.totalorder %s75, %s76
      %p87 = scmp.eq.s32.totalorder %s20, 0
      %p88 = por %p86, %p87
      %p89 = scmp.ne.s32.totalorder %s75, %s76
      %p90 = scmp.eq.s32.totalorder %s21, 3
      %p91 = por %p89, %p90
      %p93 = scmp.ne.s32.totalorder %s76, %s92
      %p94 = scmp.eq.s32.totalorder %s21, 0
      %p95 = por %p93, %p94
      %p96 = scmp.le.s32.totalorder 1, %s15
      %p97 = scmp.lt.s32.totalorder %s15, 5
      %p98 = pnand %p96, %p97
      %p99 = pneg %p98
      // Predicated region
      $region9: #{tpu_custom_call.1} parent=5 // pred_check
        _
      $region10: #{tpu_custom_call.1} parent=5 // pred_check_branch
        %101 = sbr.rel (%p98) target = $region12
      $region11: #{tpu_custom_call.1} parent=5 // pred_region
        %s102 = ssub.s32 %s15, 1
        // Predicated region
        $region13: #{tpu_custom_call.1} parent=11 // pred_check
          %p103 = pneg %p62
        $region14: #{tpu_custom_call.1} parent=11 // pred_check_branch
          %105 = sbr.rel (%p103) target = $region16
        $region15: #{tpu_custom_call.1} parent=11 // pred_region
          %s107 = ssub.s32 128, 128
          %108 = vsyncadd [#allocation6], %s107
          %s110 = sshll.u32 [#allocation5], 4
          %s111 = int_to_ptr.vmem [resolvable:$true] %s110
          %113 = dma.hbm_to_vmem [thread:$0]  %s1, 128, %s111, [#allocation6]
        $region16: #{tpu_custom_call.1} parent=11 // pred_fallthru
          _
      $region12: #{tpu_custom_call.1} parent=5 // pred_fallthru
        _
      %p114 = scmp.lt.s32.totalorder %s15, 4
      // Predicated region
      $region17: #{tpu_custom_call.1} parent=5 // pred_check
        %p115 = pneg %p114
      $region18: #{tpu_custom_call.1} parent=5 // pred_check_branch
        %117 = sbr.rel (%p115) target = $region20
      $region19: #{tpu_custom_call.1} parent=5 // pred_region
        // Predicated region
        $region21: #{tpu_custom_call.1} parent=19 // pred_check
          %p118 = pneg %p35
        $region22: #{tpu_custom_call.1} parent=19 // pred_check_branch
          %120 = sbr.rel (%p118) target = $region24
        $region23: #{tpu_custom_call.1} parent=19 // pred_region
          %s121 = sand.u32 %s25, 1
          %s122 = scalar_lea.sflag [#allocation3], %s121
          %s123 = sand.u32 %s25, 1
          %s124 = smul.addr %s123, 64
          %s125 = scalar_lea.vmem [#allocation2], %s124
          %s126 = smul.u32 2, %s15
          %s128 = ssub.s32 1024, 1024
          %129 = vsyncadd %s122, %s128
          %s130 = smul.addr %s126, 4
          %s131 = smul.addr %s130, 128
          %s132 = scalar_lea.hbm %s0, %s131
          %s133 = sshll.u32 %s125, 4
          %s134 = int_to_ptr.vmem [resolvable:$true] %s133
          %139 = dma.hbm_to_vmem [thread:$0]  %s132, 1024, %s134, %s122, 128, 128, 8
        $region24: #{tpu_custom_call.1} parent=19 // pred_fallthru
          _
      $region20: #{tpu_custom_call.1} parent=5 // pred_fallthru
        _
      %p140 = scmp.le.s32.totalorder 1, %s15
      %p141 = scmp.lt.s32.totalorder %s15, 5
      %p142 = pnand %p140, %p141
      %p143 = pneg %p142
      // Predicated region
      $region25: #{tpu_custom_call.1} parent=5 // pred_check
        _
      $region26: #{tpu_custom_call.1} parent=5 // pred_check_branch
        %145 = sbr.rel (%p142) target = $region28
      $region27: #{tpu_custom_call.1} parent=5 // pred_region
        %s146 = ssub.s32 %s15, 1
        %s147 = sand.u32 %s28, 1
        %s148 = scalar_lea.sflag [#allocation3], %s147
        %s149 = sand.u32 %s28, 1
        %s150 = smul.addr %s149, 64
        %s151 = scalar_lea.vmem [#allocation2], %s150
        // Predicated region
        $region29: #{tpu_custom_call.1} parent=27 // pred_check
          %p152 = pneg %p41
        $region30: #{tpu_custom_call.1} parent=27 // pred_check_branch
          %154 = sbr.rel (%p152) target = $region32
        $region31: #{tpu_custom_call.1} parent=27 // pred_region
          %155 = dma.done %s148, 1024
        $region32: #{tpu_custom_call.1} parent=27 // pred_fallthru
          _
        // Predicated region
        $region33: #{tpu_custom_call.1} parent=27 // pred_check
          %p156 = pneg %p62
        $region34: #{tpu_custom_call.1} parent=27 // pred_check_branch
          %158 = sbr.rel (%p156) target = $region36
        $region35: #{tpu_custom_call.1} parent=27 // pred_region
          %159 = dma.done [#allocation6], 128
        $region36: #{tpu_custom_call.1} parent=27 // pred_fallthru
          _
        %s160 = sand.u32 %s28, 1
        %s161 = scalar_lea.sflag [#allocation3], %s160
        %s162 = sand.u32 %s28, 1
        %s163 = smul.addr %s162, 64
        %s164 = scalar_lea.vmem [#allocation2], %s163
        %p165 = pneg %p41
        %p166 = pneg %p38
        %p167 = pneg %p62
        %p168 = pneg %p59
        %p169 = pneg %p88
        %p170 = pneg %p85
        %s171 = sand.u32 %s75, 1
        %s172 = scalar_lea.sflag [#allocation4], %s171
        %s173 = sand.u32 %s75, 1
        %s174 = smul.addr %s173, 256
        %s175 = scalar_lea.vmem [#allocation7], %s174
        %s176 = smul.u32 2, %s20
        %s177 = smul.u32 2, %s20
        %v178 = vld [vmem:[%s151] sm:$0xff]
        %v179 = vld [vmem:[%s151 + $0x8] sm:$0xff]
        %v180 = vld [vmem:[%s151 + $0x10] sm:$0xff]
        %v181 = vld [vmem:[%s151 + $0x18] sm:$0xff]
        %v182 = vld [vmem:[%s151 + $0x20] sm:$0xff]
        %v183 = vld [vmem:[%s151 + $0x28] sm:$0xff]
        %v184 = vld [vmem:[%s151 + $0x30] sm:$0xff]
        %v185 = vld [vmem:[%s151 + $0x38] sm:$0xff]
        %v186 = vld [vmem:[#allocation5] sm:$0xff]
        %vm187 = vcmask 64512
        %v189 = vsel %vm187, %v178, 0
        %v192 = vsel %vm187, %v179, 0
        %v195 = vsel %vm187, %v180, 0
        %v198 = vsel %vm187, %v181, 0
        %v201 = vsel %vm187, %v182, 0
        %v204 = vsel %vm187, %v183, 0
        %v207 = vsel %vm187, %v184, 0
        %v210 = vsel %vm187, %v185, 0
        %212 = vmatprep.subr.mxu0 0.0
        %213 = vmatpush1.msra.mxu0 %v186
        %214 = vmatprep.subr.mxu0 0.0
        %215 = vmatpush1.msra.mxu0 0.0
        %216 = vmatprep.subr.mxu0 0.0
        %217 = vmatpush1.msra.mxu0 0.0
        %218 = vmatprep.subr.mxu0 0.0
        %219 = vmatpush1.msra.mxu0 0.0
        %220 = vmatprep.subr.mxu0 0.0
        %221 = vmatpush1.msra.mxu0 0.0
        %222 = vmatprep.subr.mxu0 0.0
        %223 = vmatpush1.msra.mxu0 0.0
        %224 = vmatprep.subr.mxu0 0.0
        %225 = vmatpush1.msra.mxu0 0.0
        %226 = vmatprep.subr.mxu0 0.0
        %227 = vmatpush1.msra.mxu0 0.0
        %228 = vmatprep.subr.mxu0 0.0
        %229 = vmatpush1.msra.mxu0 0.0
        %230 = vmatprep.subr.mxu0 0.0
        %231 = vmatpush1.msra.mxu0 0.0
        %232 = vmatprep.subr.mxu0 0.0
        %233 = vmatpush1.msra.mxu0 0.0
        %234 = vmatprep.subr.mxu0 0.0
        %235 = vmatpush1.msra.mxu0 0.0
        %236 = vmatprep.subr.mxu0 0.0
        %237 = vmatpush1.msra.mxu0 0.0
        %238 = vmatprep.subr.mxu0 0.0
        %239 = vmatpush1.msra.mxu0 0.0
        %240 = vmatprep.subr.mxu0 0.0
        %241 = vmatpush1.msra.mxu0 0.0
        %242 = vmatprep.subr.mxu0 0.0
        %243 = vmatpush1.msra.mxu0 0.0
        %244 = vmatprep.subr.mxu0 0.0
        %245 = vmatpush1.msra.mxu0 0.0
        %246 = vmatprep.subr.mxu0 0.0
        %247 = vmatpush1.msra.mxu0 0.0
        %248 = vmatprep.subr.mxu0 0.0
        %249 = vmatpush1.msra.mxu0 0.0
        %250 = vmatprep.subr.mxu0 0.0
        %251 = vmatpush1.msra.mxu0 0.0
        %252 = vmatprep.subr.mxu0 0.0
        %253 = vmatpush1.msra.mxu0 0.0
        %254 = vmatprep.subr.mxu0 0.0
        %255 = vmatpush1.msra.mxu0 0.0
        %256 = vmatprep.subr.mxu0 0.0
        %257 = vmatpush1.msra.mxu0 0.0
        %258 = vmatprep.subr.mxu0 0.0
        %259 = vmatpush1.msra.mxu0 0.0
        %260 = vmatprep.subr.mxu0 0.0
        %261 = vmatpush1.msra.mxu0 0.0
        %262 = vmatprep.subr.mxu0 0.0
        %263 = vmatpush1.msra.mxu0 0.0
        %264 = vmatprep.subr.mxu0 0.0
        %265 = vmatpush1.msra.mxu0 0.0
        %266 = vmatprep.subr.mxu0 0.0
        %267 = vmatpush1.msra.mxu0 0.0
        %268 = vmatprep.subr.mxu0 0.0
        %269 = vmatpush1.msra.mxu0 0.0
        %270 = vmatprep.subr.mxu0 0.0
        %271 = vmatpush1.msra.mxu0 0.0
        %272 = vmatprep.subr.mxu0 0.0
        %273 = vmatpush1.msra.mxu0 0.0
        %274 = vmatprep.subr.mxu0 0.0
        %275 = vmatpush1.msra.mxu0 0.0
        %276 = vmatprep.mubr.f32.mxu0 0.0
        %277 = vmatmul.mubr.f32.gmra.mrb[0].mxu0 %v189
        %v278 = vpop.f32.mrb[0].mxu0
        %v279 = vadd.f32 0.0, %v278
        %v280 = vpop.f32.mrb[0].mxu0
        %281 = vmatprep.mubr.f32.mxu0 0.0
        %282 = vmatmul.mubr.f32.gmra.mrb[0].mxu0 %v192
        %v283 = vpop.f32.mrb[0].mxu0
        %v284 = vadd.f32 0.0, %v283
        %v285 = vpop.f32.mrb[0].mxu0
        %286 = vmatprep.mubr.f32.mxu0 0.0
        %287 = vmatmul.mubr.f32.gmra.mrb[0].mxu0 %v195
        %v288 = vpop.f32.mrb[0].mxu0
        %v289 = vadd.f32 0.0, %v288
        %v290 = vpop.f32.mrb[0].mxu0
        %291 = vmatprep.mubr.f32.mxu0 0.0
        %292 = vmatmul.mubr.f32.gmra.mrb[0].mxu0 %v198
        %v293 = vpop.f32.mrb[0].mxu0
        %v294 = vadd.f32 0.0, %v293
        %v295 = vpop.f32.mrb[0].mxu0
        %296 = vmatprep.mubr.f32.mxu0 0.0
        %297 = vmatmul.mubr.f32.gmra.mrb[0].mxu0 %v201
        %v298 = vpop.f32.mrb[0].mxu0
        %v299 = vadd.f32 0.0, %v298
        %v300 = vpop.f32.mrb[0].mxu0
        %301 = vmatprep.mubr.f32.mxu0 0.0
        %302 = vmatmul.mubr.f32.gmra.mrb[0].mxu0 %v204
        %v303 = vpop.f32.mrb[0].mxu0
        %v304 = vadd.f32 0.0, %v303
        %v305 = vpop.f32.mrb[0].mxu0
        %306 = vmatprep.mubr.f32.mxu0 0.0
        %307 = vmatmul.mubr.f32.gmra.mrb[0].mxu0 %v207
        %v308 = vpop.f32.mrb[0].mxu0
        %v309 = vadd.f32 0.0, %v308
        %v310 = vpop.f32.mrb[0].mxu0
        %311 = vmatprep.mubr.f32.mxu0 0.0
        %312 = vmatmul.mubr.f32.gmra.mrb[0].mxu0 %v210
        %v313 = vpop.f32.mrb[0].mxu0
        %v314 = vadd.f32 0.0, %v313
        %v315 = vpop.f32.mrb[0].mxu0
        %316 = vdwg.mxu0
        %v325 = vcombine.high %v279, %v279
        %v327 = vunpack.c.l.s4 1966171168
        %v328 = vunpack.c.0.s8 %v327
        %v329 = vlaneseq
        %v330 = vshrl.u32 %v329, 7
        %v331 = vsub.s32 %v328, %v330
        %v332 = vrot.slane %v279, %v331
        %v334 = vunpack.c.l.s4 1966171168
        %v335 = vunpack.c.0.s8 %v334
        %v336 = vlaneseq
        %v337 = vshrl.u32 %v336, 7
        %v338 = vsub.s32 %v335, %v337
        %v339 = vrot.slane %v325, %v338
        %v340 = vcombine.high %v332, %v332
        %v341 = vcombine.high %v339, %v339
        %v343 = vunpack.c.l.s4 1966171168
        %v344 = vunpack.c.0.s8 %v343
        %v345 = vlaneseq
        %v346 = vshrl.u32 %v345, 7
        %v347 = vsub.s32 %v344, %v346
        %v348 = vrot.slane %v332, %v347
        %v350 = vunpack.c.l.s4 1966171168
        %v351 = vunpack.c.0.s8 %v350
        %v352 = vlaneseq
        %v353 = vshrl.u32 %v352, 7
        %v354 = vsub.s32 %v351, %v353
        %v355 = vrot.slane %v339, %v354
        %v357 = vunpack.c.l.s4 1966171168
        %v358 = vunpack.c.0.s8 %v357
        %v359 = vlaneseq
        %v360 = vshrl.u32 %v359, 7
        %v361 = vsub.s32 %v358, %v360
        %v362 = vrot.slane %v340, %v361
        %v364 = vunpack.c.l.s4 1966171168
        %v365 = vunpack.c.0.s8 %v364
        %v366 = vlaneseq
        %v367 = vshrl.u32 %v366, 7
        %v368 = vsub.s32 %v365, %v367
        %v369 = vrot.slane %v341, %v368
        %v370 = vcombine.high %v348, %v348
        %v371 = vcombine.high %v355, %v355
        %v372 = vcombine.high %v362, %v362
        %v373 = vcombine.high %v369, %v369
        %v374 = vcombine.high %v284, %v284
        %v376 = vunpack.c.l.s4 1966171168
        %v377 = vunpack.c.0.s8 %v376
        %v378 = vlaneseq
        %v379 = vshrl.u32 %v378, 7
        %v380 = vsub.s32 %v377, %v379
        %v381 = vrot.slane %v284, %v380
        %v383 = vunpack.c.l.s4 1966171168
        %v384 = vunpack.c.0.s8 %v383
        %v385 = vlaneseq
        %v386 = vshrl.u32 %v385, 7
        %v387 = vsub.s32 %v384, %v386
        %v388 = vrot.slane %v374, %v387
        %v389 = vcombine.high %v381, %v381
        %v390 = vcombine.high %v388, %v388
        %v392 = vunpack.c.l.s4 1966171168
        %v393 = vunpack.c.0.s8 %v392
        %v394 = vlaneseq
        %v395 = vshrl.u32 %v394, 7
        %v396 = vsub.s32 %v393, %v395
        %v397 = vrot.slane %v381, %v396
        %v399 = vunpack.c.l.s4 1966171168
        %v400 = vunpack.c.0.s8 %v399
        %v401 = vlaneseq
        %v402 = vshrl.u32 %v401, 7
        %v403 = vsub.s32 %v400, %v402
        %v404 = vrot.slane %v388, %v403
        %v406 = vunpack.c.l.s4 1966171168
        %v407 = vunpack.c.0.s8 %v406
        %v408 = vlaneseq
        %v409 = vshrl.u32 %v408, 7
        %v410 = vsub.s32 %v407, %v409
        %v411 = vrot.slane %v389, %v410
        %v413 = vunpack.c.l.s4 1966171168
        %v414 = vunpack.c.0.s8 %v413
        %v415 = vlaneseq
        %v416 = vshrl.u32 %v415, 7
        %v417 = vsub.s32 %v414, %v416
        %v418 = vrot.slane %v390, %v417
        %v419 = vcombine.high %v397, %v397
        %v420 = vcombine.high %v404, %v404
        %v421 = vcombine.high %v411, %v411
        %v422 = vcombine.high %v418, %v418
        %v423 = vcombine.high %v289, %v289
        %v425 = vunpack.c.l.s4 1966171168
        %v426 = vunpack.c.0.s8 %v425
        %v427 = vlaneseq
        %v428 = vshrl.u32 %v427, 7
        %v429 = vsub.s32 %v426, %v428
        %v430 = vrot.slane %v289, %v429
        %v432 = vunpack.c.l.s4 1966171168
        %v433 = vunpack.c.0.s8 %v432
        %v434 = vlaneseq
        %v435 = vshrl.u32 %v434, 7
        %v436 = vsub.s32 %v433, %v435
        %v437 = vrot.slane %v423, %v436
        %v438 = vcombine.high %v430, %v430
        %v439 = vcombine.high %v437, %v437
        %v441 = vunpack.c.l.s4 1966171168
        %v442 = vunpack.c.0.s8 %v441
        %v443 = vlaneseq
        %v444 = vshrl.u32 %v443, 7
        %v445 = vsub.s32 %v442, %v444
        %v446 = vrot.slane %v430, %v445
        %v448 = vunpack.c.l.s4 1966171168
        %v449 = vunpack.c.0.s8 %v448
        %v450 = vlaneseq
        %v451 = vshrl.u32 %v450, 7
        %v452 = vsub.s32 %v449, %v451
        %v453 = vrot.slane %v437, %v452
        %v455 = vunpack.c.l.s4 1966171168
        %v456 = vunpack.c.0.s8 %v455
        %v457 = vlaneseq
        %v458 = vshrl.u32 %v457, 7
        %v459 = vsub.s32 %v456, %v458
        %v460 = vrot.slane %v438, %v459
        %v462 = vunpack.c.l.s4 1966171168
        %v463 = vunpack.c.0.s8 %v462
        %v464 = vlaneseq
        %v465 = vshrl.u32 %v464, 7
        %v466 = vsub.s32 %v463, %v465
        %v467 = vrot.slane %v439, %v466
        %v468 = vcombine.high %v446, %v446
        %v469 = vcombine.high %v453, %v453
        %v470 = vcombine.high %v460, %v460
        %v471 = vcombine.high %v467, %v467
        %v472 = vcombine.high %v294, %v294
        %v474 = vunpack.c.l.s4 1966171168
        %v475 = vunpack.c.0.s8 %v474
        %v476 = vlaneseq
        %v477 = vshrl.u32 %v476, 7
        %v478 = vsub.s32 %v475, %v477
        %v479 = vrot.slane %v294, %v478
        %v481 = vunpack.c.l.s4 1966171168
        %v482 = vunpack.c.0.s8 %v481
        %v483 = vlaneseq
        %v484 = vshrl.u32 %v483, 7
        %v485 = vsub.s32 %v482, %v484
        %v486 = vrot.slane %v472, %v485
        %v487 = vcombine.high %v479, %v479
        %v488 = vcombine.high %v486, %v486
        %v490 = vunpack.c.l.s4 1966171168
        %v491 = vunpack.c.0.s8 %v490
        %v492 = vlaneseq
        %v493 = vshrl.u32 %v492, 7
        %v494 = vsub.s32 %v491, %v493
        %v495 = vrot.slane %v479, %v494
        %v497 = vunpack.c.l.s4 1966171168
        %v498 = vunpack.c.0.s8 %v497
        %v499 = vlaneseq
        %v500 = vshrl.u32 %v499, 7
        %v501 = vsub.s32 %v498, %v500
        %v502 = vrot.slane %v486, %v501
        %v504 = vunpack.c.l.s4 1966171168
        %v505 = vunpack.c.0.s8 %v504
        %v506 = vlaneseq
        %v507 = vshrl.u32 %v506, 7
        %v508 = vsub.s32 %v505, %v507
        %v509 = vrot.slane %v487, %v508
        %v511 = vunpack.c.l.s4 1966171168
        %v512 = vunpack.c.0.s8 %v511
        %v513 = vlaneseq
        %v514 = vshrl.u32 %v513, 7
        %v515 = vsub.s32 %v512, %v514
        %v516 = vrot.slane %v488, %v515
        %v517 = vcombine.high %v495, %v495
        %v518 = vcombine.high %v502, %v502
        %v519 = vcombine.high %v509, %v509
        %v520 = vcombine.high %v516, %v516
        %v521 = vcombine.high %v299, %v299
        %v523 = vunpack.c.l.s4 1966171168
        %v524 = vunpack.c.0.s8 %v523
        %v525 = vlaneseq
        %v526 = vshrl.u32 %v525, 7
        %v527 = vsub.s32 %v524, %v526
        %v528 = vrot.slane %v299, %v527
        %v530 = vunpack.c.l.s4 1966171168
        %v531 = vunpack.c.0.s8 %v530
        %v532 = vlaneseq
        %v533 = vshrl.u32 %v532, 7
        %v534 = vsub.s32 %v531, %v533
        %v535 = vrot.slane %v521, %v534
        %v536 = vcombine.high %v528, %v528
        %v537 = vcombine.high %v535, %v535
        %v539 = vunpack.c.l.s4 1966171168
        %v540 = vunpack.c.0.s8 %v539
        %v541 = vlaneseq
        %v542 = vshrl.u32 %v541, 7
        %v543 = vsub.s32 %v540, %v542
        %v544 = vrot.slane %v528, %v543
        %v546 = vunpack.c.l.s4 1966171168
        %v547 = vunpack.c.0.s8 %v546
        %v548 = vlaneseq
        %v549 = vshrl.u32 %v548, 7
        %v550 = vsub.s32 %v547, %v549
        %v551 = vrot.slane %v535, %v550
        %v553 = vunpack.c.l.s4 1966171168
        %v554 = vunpack.c.0.s8 %v553
        %v555 = vlaneseq
        %v556 = vshrl.u32 %v555, 7
        %v557 = vsub.s32 %v554, %v556
        %v558 = vrot.slane %v536, %v557
        %v560 = vunpack.c.l.s4 1966171168
        %v561 = vunpack.c.0.s8 %v560
        %v562 = vlaneseq
        %v563 = vshrl.u32 %v562, 7
        %v564 = vsub.s32 %v561, %v563
        %v565 = vrot.slane %v537, %v564
        %v566 = vcombine.high %v544, %v544
        %v567 = vcombine.high %v551, %v551
        %v568 = vcombine.high %v558, %v558
        %v569 = vcombine.high %v565, %v565
        %v570 = vcombine.high %v304, %v304
        %v572 = vunpack.c.l.s4 1966171168
        %v573 = vunpack.c.0.s8 %v572
        %v574 = vlaneseq
        %v575 = vshrl.u32 %v574, 7
        %v576 = vsub.s32 %v573, %v575
        %v577 = vrot.slane %v304, %v576
        %v579 = vunpack.c.l.s4 1966171168
        %v580 = vunpack.c.0.s8 %v579
        %v581 = vlaneseq
        %v582 = vshrl.u32 %v581, 7
        %v583 = vsub.s32 %v580, %v582
        %v584 = vrot.slane %v570, %v583
        %v585 = vcombine.high %v577, %v577
        %v586 = vcombine.high %v584, %v584
        %v588 = vunpack.c.l.s4 1966171168
        %v589 = vunpack.c.0.s8 %v588
        %v590 = vlaneseq
        %v591 = vshrl.u32 %v590, 7
        %v592 = vsub.s32 %v589, %v591
        %v593 = vrot.slane %v577, %v592
        %v595 = vunpack.c.l.s4 1966171168
        %v596 = vunpack.c.0.s8 %v595
        %v597 = vlaneseq
        %v598 = vshrl.u32 %v597, 7
        %v599 = vsub.s32 %v596, %v598
        %v600 = vrot.slane %v584, %v599
        %v602 = vunpack.c.l.s4 1966171168
        %v603 = vunpack.c.0.s8 %v602
        %v604 = vlaneseq
        %v605 = vshrl.u32 %v604, 7
        %v606 = vsub.s32 %v603, %v605
        %v607 = vrot.slane %v585, %v606
        %v609 = vunpack.c.l.s4 1966171168
        %v610 = vunpack.c.0.s8 %v609
        %v611 = vlaneseq
        %v612 = vshrl.u32 %v611, 7
        %v613 = vsub.s32 %v610, %v612
        %v614 = vrot.slane %v586, %v613
        %v615 = vcombine.high %v593, %v593
        %v616 = vcombine.high %v600, %v600
        %v617 = vcombine.high %v607, %v607
        %v618 = vcombine.high %v614, %v614
        %v619 = vcombine.high %v309, %v309
        %v621 = vunpack.c.l.s4 1966171168
        %v622 = vunpack.c.0.s8 %v621
        %v623 = vlaneseq
        %v624 = vshrl.u32 %v623, 7
        %v625 = vsub.s32 %v622, %v624
        %v626 = vrot.slane %v309, %v625
        %v628 = vunpack.c.l.s4 1966171168
        %v629 = vunpack.c.0.s8 %v628
        %v630 = vlaneseq
        %v631 = vshrl.u32 %v630, 7
        %v632 = vsub.s32 %v629, %v631
        %v633 = vrot.slane %v619, %v632
        %v634 = vcombine.high %v626, %v626
        %v635 = vcombine.high %v633, %v633
        %v637 = vunpack.c.l.s4 1966171168
        %v638 = vunpack.c.0.s8 %v637
        %v639 = vlaneseq
        %v640 = vshrl.u32 %v639, 7
        %v641 = vsub.s32 %v638, %v640
        %v642 = vrot.slane %v626, %v641
        %v644 = vunpack.c.l.s4 1966171168
        %v645 = vunpack.c.0.s8 %v644
        %v646 = vlaneseq
        %v647 = vshrl.u32 %v646, 7
        %v648 = vsub.s32 %v645, %v647
        %v649 = vrot.slane %v633, %v648
        %v651 = vunpack.c.l.s4 1966171168
        %v652 = vunpack.c.0.s8 %v651
        %v653 = vlaneseq
        %v654 = vshrl.u32 %v653, 7
        %v655 = vsub.s32 %v652, %v654
        %v656 = vrot.slane %v634, %v655
        %v658 = vunpack.c.l.s4 1966171168
        %v659 = vunpack.c.0.s8 %v658
        %v660 = vlaneseq
        %v661 = vshrl.u32 %v660, 7
        %v662 = vsub.s32 %v659, %v661
        %v663 = vrot.slane %v635, %v662
        %v664 = vcombine.high %v642, %v642
        %v665 = vcombine.high %v649, %v649
        %v666 = vcombine.high %v656, %v656
        %v667 = vcombine.high %v663, %v663
        %v668 = vcombine.high %v314, %v314
        %v670 = vunpack.c.l.s4 1966171168
        %v671 = vunpack.c.0.s8 %v670
        %v672 = vlaneseq
        %v673 = vshrl.u32 %v672, 7
        %v674 = vsub.s32 %v671, %v673
        %v675 = vrot.slane %v314, %v674
        %v677 = vunpack.c.l.s4 1966171168
        %v678 = vunpack.c.0.s8 %v677
        %v679 = vlaneseq
        %v680 = vshrl.u32 %v679, 7
        %v681 = vsub.s32 %v678, %v680
        %v682 = vrot.slane %v668, %v681
        %v683 = vcombine.high %v675, %v675
        %v684 = vcombine.high %v682, %v682
        %v686 = vunpack.c.l.s4 1966171168
        %v687 = vunpack.c.0.s8 %v686
        %v688 = vlaneseq
        %v689 = vshrl.u32 %v688, 7
        %v690 = vsub.s32 %v687, %v689
        %v691 = vrot.slane %v675, %v690
        %v693 = vunpack.c.l.s4 1966171168
        %v694 = vunpack.c.0.s8 %v693
        %v695 = vlaneseq
        %v696 = vshrl.u32 %v695, 7
        %v697 = vsub.s32 %v694, %v696
        %v698 = vrot.slane %v682, %v697
        %v700 = vunpack.c.l.s4 1966171168
        %v701 = vunpack.c.0.s8 %v700
        %v702 = vlaneseq
        %v703 = vshrl.u32 %v702, 7
        %v704 = vsub.s32 %v701, %v703
        %v705 = vrot.slane %v683, %v704
        %v707 = vunpack.c.l.s4 1966171168
        %v708 = vunpack.c.0.s8 %v707
        %v709 = vlaneseq
        %v710 = vshrl.u32 %v709, 7
        %v711 = vsub.s32 %v708, %v710
        %v712 = vrot.slane %v684, %v711
        %v713 = vcombine.high %v691, %v691
        %v714 = vcombine.high %v698, %v698
        %v715 = vcombine.high %v705, %v705
        %v716 = vcombine.high %v712, %v712
        %v717 = vlaneseq
        %v718 = vshrl.u32 %v717, 7
        %v719 = vsub.s32 0, %v718
        %v720 = vrot.slane %v348, %v719
        %v721 = vlaneseq
        %v722 = vshrl.u32 %v721, 7
        %v723 = vsub.s32 0, %v722
        %v724 = vrot.slane %v362, %v723
        %v725 = vlaneseq
        %v726 = vshrl.u32 %v725, 7
        %v727 = vsub.s32 0, %v726
        %v728 = vrot.slane %v370, %v727
        %v729 = vlaneseq
        %v730 = vshrl.u32 %v729, 7
        %v731 = vsub.s32 0, %v730
        %v732 = vrot.slane %v372, %v731
        %v733 = vlaneseq
        %v734 = vshrl.u32 %v733, 7
        %v735 = vsub.s32 0, %v734
        %v736 = vrot.slane %v355, %v735
        %v737 = vlaneseq
        %v738 = vshrl.u32 %v737, 7
        %v739 = vsub.s32 0, %v738
        %v740 = vrot.slane %v369, %v739
        %v741 = vlaneseq
        %v742 = vshrl.u32 %v741, 7
        %v743 = vsub.s32 0, %v742
        %v744 = vrot.slane %v371, %v743
        %v745 = vlaneseq
        %v746 = vshrl.u32 %v745, 7
        %v747 = vsub.s32 0, %v746
        %v748 = vrot.slane %v373, %v747
        %v749 = vlaneseq
        %v750 = vshrl.u32 %v749, 7
        %v751 = vsub.s32 0, %v750
        %v752 = vrot.slane %v397, %v751
        %v753 = vlaneseq
        %v754 = vshrl.u32 %v753, 7
        %v755 = vsub.s32 0, %v754
        %v756 = vrot.slane %v411, %v755
        %v757 = vlaneseq
        %v758 = vshrl.u32 %v757, 7
        %v759 = vsub.s32 0, %v758
        %v760 = vrot.slane %v419, %v759
        %v761 = vlaneseq
        %v762 = vshrl.u32 %v761, 7
        %v763 = vsub.s32 0, %v762
        %v764 = vrot.slane %v421, %v763
        %v765 = vlaneseq
        %v766 = vshrl.u32 %v765, 7
        %v767 = vsub.s32 0, %v766
        %v768 = vrot.slane %v404, %v767
        %v769 = vlaneseq
        %v770 = vshrl.u32 %v769, 7
        %v771 = vsub.s32 0, %v770
        %v772 = vrot.slane %v418, %v771
        %v773 = vlaneseq
        %v774 = vshrl.u32 %v773, 7
        %v775 = vsub.s32 0, %v774
        %v776 = vrot.slane %v420, %v775
        %v777 = vlaneseq
        %v778 = vshrl.u32 %v777, 7
        %v779 = vsub.s32 0, %v778
        %v780 = vrot.slane %v422, %v779
        %v781 = vlaneseq
        %v782 = vshrl.u32 %v781, 7
        %v783 = vsub.s32 0, %v782
        %v784 = vrot.slane %v446, %v783
        %v785 = vlaneseq
        %v786 = vshrl.u32 %v785, 7
        %v787 = vsub.s32 0, %v786
        %v788 = vrot.slane %v460, %v787
        %v789 = vlaneseq
        %v790 = vshrl.u32 %v789, 7
        %v791 = vsub.s32 0, %v790
        %v792 = vrot.slane %v468, %v791
        %v793 = vlaneseq
        %v794 = vshrl.u32 %v793, 7
        %v795 = vsub.s32 0, %v794
        %v796 = vrot.slane %v470, %v795
        %v797 = vlaneseq
        %v798 = vshrl.u32 %v797, 7
        %v799 = vsub.s32 0, %v798
        %v800 = vrot.slane %v453, %v799
        %v801 = vlaneseq
        %v802 = vshrl.u32 %v801, 7
        %v803 = vsub.s32 0, %v802
        %v804 = vrot.slane %v467, %v803
        %v805 = vlaneseq
        %v806 = vshrl.u32 %v805, 7
        %v807 = vsub.s32 0, %v806
        %v808 = vrot.slane %v469, %v807
        %v809 = vlaneseq
        %v810 = vshrl.u32 %v809, 7
        %v811 = vsub.s32 0, %v810
        %v812 = vrot.slane %v471, %v811
        %v813 = vlaneseq
        %v814 = vshrl.u32 %v813, 7
        %v815 = vsub.s32 0, %v814
        %v816 = vrot.slane %v495, %v815
        %v817 = vlaneseq
        %v818 = vshrl.u32 %v817, 7
        %v819 = vsub.s32 0, %v818
        %v820 = vrot.slane %v509, %v819
        %v821 = vlaneseq
        %v822 = vshrl.u32 %v821, 7
        %v823 = vsub.s32 0, %v822
        %v824 = vrot.slane %v517, %v823
        %v825 = vlaneseq
        %v826 = vshrl.u32 %v825, 7
        %v827 = vsub.s32 0, %v826
        %v828 = vrot.slane %v519, %v827
        %v829 = vlaneseq
        %v830 = vshrl.u32 %v829, 7
        %v831 = vsub.s32 0, %v830
        %v832 = vrot.slane %v502, %v831
        %v833 = vlaneseq
        %v834 = vshrl.u32 %v833, 7
        %v835 = vsub.s32 0, %v834
        %v836 = vrot.slane %v516, %v835
        %v837 = vlaneseq
        %v838 = vshrl.u32 %v837, 7
        %v839 = vsub.s32 0, %v838
        %v840 = vrot.slane %v518, %v839
        %v841 = vlaneseq
        %v842 = vshrl.u32 %v841, 7
        %v843 = vsub.s32 0, %v842
        %v844 = vrot.slane %v520, %v843
        %v845 = vlaneseq
        %v846 = vshrl.u32 %v845, 7
        %v847 = vsub.s32 0, %v846
        %v848 = vrot.slane %v544, %v847
        %v849 = vlaneseq
        %v850 = vshrl.u32 %v849, 7
        %v851 = vsub.s32 0, %v850
        %v852 = vrot.slane %v558, %v851
        %v853 = vlaneseq
        %v854 = vshrl.u32 %v853, 7
        %v855 = vsub.s32 0, %v854
        %v856 = vrot.slane %v566, %v855
        %v857 = vlaneseq
        %v858 = vshrl.u32 %v857, 7
        %v859 = vsub.s32 0, %v858
        %v860 = vrot.slane %v568, %v859
        %v861 = vlaneseq
        %v862 = vshrl.u32 %v861, 7
        %v863 = vsub.s32 0, %v862
        %v864 = vrot.slane %v551, %v863
        %v865 = vlaneseq
        %v866 = vshrl.u32 %v865, 7
        %v867 = vsub.s32 0, %v866
        %v868 = vrot.slane %v565, %v867
        %v869 = vlaneseq
        %v870 = vshrl.u32 %v869, 7
        %v871 = vsub.s32 0, %v870
        %v872 = vrot.slane %v567, %v871
        %v873 = vlaneseq
        %v874 = vshrl.u32 %v873, 7
        %v875 = vsub.s32 0, %v874
        %v876 = vrot.slane %v569, %v875
        %v877 = vlaneseq
        %v878 = vshrl.u32 %v877, 7
        %v879 = vsub.s32 0, %v878
        %v880 = vrot.slane %v593, %v879
        %v881 = vlaneseq
        %v882 = vshrl.u32 %v881, 7
        %v883 = vsub.s32 0, %v882
        %v884 = vrot.slane %v607, %v883
        %v885 = vlaneseq
        %v886 = vshrl.u32 %v885, 7
        %v887 = vsub.s32 0, %v886
        %v888 = vrot.slane %v615, %v887
        %v889 = vlaneseq
        %v890 = vshrl.u32 %v889, 7
        %v891 = vsub.s32 0, %v890
        %v892 = vrot.slane %v617, %v891
        %v893 = vlaneseq
        %v894 = vshrl.u32 %v893, 7
        %v895 = vsub.s32 0, %v894
        %v896 = vrot.slane %v600, %v895
        %v897 = vlaneseq
        %v898 = vshrl.u32 %v897, 7
        %v899 = vsub.s32 0, %v898
        %v900 = vrot.slane %v614, %v899
        %v901 = vlaneseq
        %v902 = vshrl.u32 %v901, 7
        %v903 = vsub.s32 0, %v902
        %v904 = vrot.slane %v616, %v903
        %v905 = vlaneseq
        %v906 = vshrl.u32 %v905, 7
        %v907 = vsub.s32 0, %v906
        %v908 = vrot.slane %v618, %v907
        %v909 = vlaneseq
        %v910 = vshrl.u32 %v909, 7
        %v911 = vsub.s32 0, %v910
        %v912 = vrot.slane %v642, %v911
        %v913 = vlaneseq
        %v914 = vshrl.u32 %v913, 7
        %v915 = vsub.s32 0, %v914
        %v916 = vrot.slane %v656, %v915
        %v917 = vlaneseq
        %v918 = vshrl.u32 %v917, 7
        %v919 = vsub.s32 0, %v918
        %v920 = vrot.slane %v664, %v919
        %v921 = vlaneseq
        %v922 = vshrl.u32 %v921, 7
        %v923 = vsub.s32 0, %v922
        %v924 = vrot.slane %v666, %v923
        %v925 = vlaneseq
        %v926 = vshrl.u32 %v925, 7
        %v927 = vsub.s32 0, %v926
        %v928 = vrot.slane %v649, %v927
        %v929 = vlaneseq
        %v930 = vshrl.u32 %v929, 7
        %v931 = vsub.s32 0, %v930
        %v932 = vrot.slane %v663, %v931
        %v933 = vlaneseq
        %v934 = vshrl.u32 %v933, 7
        %v935 = vsub.s32 0, %v934
        %v936 = vrot.slane %v665, %v935
        %v937 = vlaneseq
        %v938 = vshrl.u32 %v937, 7
        %v939 = vsub.s32 0, %v938
        %v940 = vrot.slane %v667, %v939
        %v941 = vlaneseq
        %v942 = vshrl.u32 %v941, 7
        %v943 = vsub.s32 0, %v942
        %v944 = vrot.slane %v691, %v943
        %v945 = vlaneseq
        %v946 = vshrl.u32 %v945, 7
        %v947 = vsub.s32 0, %v946
        %v948 = vrot.slane %v705, %v947
        %v949 = vlaneseq
        %v950 = vshrl.u32 %v949, 7
        %v951 = vsub.s32 0, %v950
        %v952 = vrot.slane %v713, %v951
        %v953 = vlaneseq
        %v954 = vshrl.u32 %v953, 7
        %v955 = vsub.s32 0, %v954
        %v956 = vrot.slane %v715, %v955
        %v957 = vlaneseq
        %v958 = vshrl.u32 %v957, 7
        %v959 = vsub.s32 0, %v958
        %v960 = vrot.slane %v698, %v959
        %v961 = vlaneseq
        %v962 = vshrl.u32 %v961, 7
        %v963 = vsub.s32 0, %v962
        %v964 = vrot.slane %v712, %v963
        %v965 = vlaneseq
        %v966 = vshrl.u32 %v965, 7
        %v967 = vsub.s32 0, %v966
        %v968 = vrot.slane %v714, %v967
        %v969 = vlaneseq
        %v970 = vshrl.u32 %v969, 7
        %v971 = vsub.s32 0, %v970
        %v972 = vrot.slane %v716, %v971
        %v973 = vcombine.low %v720, %v724
        %v974 = vcombine.low %v728, %v732
        %v976 = vunpack.c.l.s4 1983009808
        %v977 = vunpack.c.0.s8 %v976
        %v978 = vlaneseq
        %v979 = vshrl.u32 %v978, 7
        %v980 = vsub.s32 %v977, %v979
        %v981 = vrot.slane %v973, %v980
        %v983 = vunpack.c.l.s4 1983009808
        %v984 = vunpack.c.0.s8 %v983
        %v985 = vlaneseq
        %v986 = vshrl.u32 %v985, 7
        %v987 = vsub.s32 %v984, %v986
        %v988 = vrot.slane %v974, %v987
        %v989 = vcombine.low %v981, %v988
        %v990 = vcombine.low %v736, %v740
        %v991 = vcombine.low %v744, %v748
        %v993 = vunpack.c.l.s4 1983009808
        %v994 = vunpack.c.0.s8 %v993
        %v995 = vlaneseq
        %v996 = vshrl.u32 %v995, 7
        %v997 = vsub.s32 %v994, %v996
        %v998 = vrot.slane %v990, %v997
        %v1000 = vunpack.c.l.s4 1983009808
        %v1001 = vunpack.c.0.s8 %v1000
        %v1002 = vlaneseq
        %v1003 = vshrl.u32 %v1002, 7
        %v1004 = vsub.s32 %v1001, %v1003
        %v1005 = vrot.slane %v991, %v1004
        %v1006 = vcombine.low %v998, %v1005
        %v1007 = vcombine.low %v752, %v756
        %v1008 = vcombine.low %v760, %v764
        %v1010 = vunpack.c.l.s4 1983009808
        %v1011 = vunpack.c.0.s8 %v1010
        %v1012 = vlaneseq
        %v1013 = vshrl.u32 %v1012, 7
        %v1014 = vsub.s32 %v1011, %v1013
        %v1015 = vrot.slane %v1007, %v1014
        %v1017 = vunpack.c.l.s4 1983009808
        %v1018 = vunpack.c.0.s8 %v1017
        %v1019 = vlaneseq
        %v1020 = vshrl.u32 %v1019, 7
        %v1021 = vsub.s32 %v1018, %v1020
        %v1022 = vrot.slane %v1008, %v1021
        %v1023 = vcombine.low %v1015, %v1022
        %v1024 = vcombine.low %v768, %v772
        %v1025 = vcombine.low %v776, %v780
        %v1027 = vunpack.c.l.s4 1983009808
        %v1028 = vunpack.c.0.s8 %v1027
        %v1029 = vlaneseq
        %v1030 = vshrl.u32 %v1029, 7
        %v1031 = vsub.s32 %v1028, %v1030
        %v1032 = vrot.slane %v1024, %v1031
        %v1034 = vunpack.c.l.s4 1983009808
        %v1035 = vunpack.c.0.s8 %v1034
        %v1036 = vlaneseq
        %v1037 = vshrl.u32 %v1036, 7
        %v1038 = vsub.s32 %v1035, %v1037
        %v1039 = vrot.slane %v1025, %v1038
        %v1040 = vcombine.low %v1032, %v1039
        %v1041 = vcombine.low %v784, %v788
        %v1042 = vcombine.low %v792, %v796
        %v1044 = vunpack.c.l.s4 1983009808
        %v1045 = vunpack.c.0.s8 %v1044
        %v1046 = vlaneseq
        %v1047 = vshrl.u32 %v1046, 7
        %v1048 = vsub.s32 %v1045, %v1047
        %v1049 = vrot.slane %v1041, %v1048
        %v1051 = vunpack.c.l.s4 1983009808
        %v1052 = vunpack.c.0.s8 %v1051
        %v1053 = vlaneseq
        %v1054 = vshrl.u32 %v1053, 7
        %v1055 = vsub.s32 %v1052, %v1054
        %v1056 = vrot.slane %v1042, %v1055
        %v1057 = vcombine.low %v1049, %v1056
        %v1058 = vcombine.low %v800, %v804
        %v1059 = vcombine.low %v808, %v812
        %v1061 = vunpack.c.l.s4 1983009808
        %v1062 = vunpack.c.0.s8 %v1061
        %v1063 = vlaneseq
        %v1064 = vshrl.u32 %v1063, 7
        %v1065 = vsub.s32 %v1062, %v1064
        %v1066 = vrot.slane %v1058, %v1065
        %v1068 = vunpack.c.l.s4 1983009808
        %v1069 = vunpack.c.0.s8 %v1068
        %v1070 = vlaneseq
        %v1071 = vshrl.u32 %v1070, 7
        %v1072 = vsub.s32 %v1069, %v1071
        %v1073 = vrot.slane %v1059, %v1072
        %v1074 = vcombine.low %v1066, %v1073
        %v1075 = vcombine.low %v816, %v820
        %v1076 = vcombine.low %v824, %v828
        %v1078 = vunpack.c.l.s4 1983009808
        %v1079 = vunpack.c.0.s8 %v1078
        %v1080 = vlaneseq
        %v1081 = vshrl.u32 %v1080, 7
        %v1082 = vsub.s32 %v1079, %v1081
        %v1083 = vrot.slane %v1075, %v1082
        %v1085 = vunpack.c.l.s4 1983009808
        %v1086 = vunpack.c.0.s8 %v1085
        %v1087 = vlaneseq
        %v1088 = vshrl.u32 %v1087, 7
        %v1089 = vsub.s32 %v1086, %v1088
        %v1090 = vrot.slane %v1076, %v1089
        %v1091 = vcombine.low %v1083, %v1090
        %v1092 = vcombine.low %v832, %v836
        %v1093 = vcombine.low %v840, %v844
        %v1095 = vunpack.c.l.s4 1983009808
        %v1096 = vunpack.c.0.s8 %v1095
        %v1097 = vlaneseq
        %v1098 = vshrl.u32 %v1097, 7
        %v1099 = vsub.s32 %v1096, %v1098
        %v1100 = vrot.slane %v1092, %v1099
        %v1102 = vunpack.c.l.s4 1983009808
        %v1103 = vunpack.c.0.s8 %v1102
        %v1104 = vlaneseq
        %v1105 = vshrl.u32 %v1104, 7
        %v1106 = vsub.s32 %v1103, %v1105
        %v1107 = vrot.slane %v1093, %v1106
        %v1108 = vcombine.low %v1100, %v1107
        %v1109 = vcombine.low %v848, %v852
        %v1110 = vcombine.low %v856, %v860
        %v1112 = vunpack.c.l.s4 1983009808
        %v1113 = vunpack.c.0.s8 %v1112
        %v1114 = vlaneseq
        %v1115 = vshrl.u32 %v1114, 7
        %v1116 = vsub.s32 %v1113, %v1115
        %v1117 = vrot.slane %v1109, %v1116
        %v1119 = vunpack.c.l.s4 1983009808
        %v1120 = vunpack.c.0.s8 %v1119
        %v1121 = vlaneseq
        %v1122 = vshrl.u32 %v1121, 7
        %v1123 = vsub.s32 %v1120, %v1122
        %v1124 = vrot.slane %v1110, %v1123
        %v1125 = vcombine.low %v1117, %v1124
        %v1126 = vcombine.low %v864, %v868
        %v1127 = vcombine.low %v872, %v876
        %v1129 = vunpack.c.l.s4 1983009808
        %v1130 = vunpack.c.0.s8 %v1129
        %v1131 = vlaneseq
        %v1132 = vshrl.u32 %v1131, 7
        %v1133 = vsub.s32 %v1130, %v1132
        %v1134 = vrot.slane %v1126, %v1133
        %v1136 = vunpack.c.l.s4 1983009808
        %v1137 = vunpack.c.0.s8 %v1136
        %v1138 = vlaneseq
        %v1139 = vshrl.u32 %v1138, 7
        %v1140 = vsub.s32 %v1137, %v1139
        %v1141 = vrot.slane %v1127, %v1140
        %v1142 = vcombine.low %v1134, %v1141
        %v1143 = vcombine.low %v880, %v884
        %v1144 = vcombine.low %v888, %v892
        %v1146 = vunpack.c.l.s4 1983009808
        %v1147 = vunpack.c.0.s8 %v1146
        %v1148 = vlaneseq
        %v1149 = vshrl.u32 %v1148, 7
        %v1150 = vsub.s32 %v1147, %v1149
        %v1151 = vrot.slane %v1143, %v1150
        %v1153 = vunpack.c.l.s4 1983009808
        %v1154 = vunpack.c.0.s8 %v1153
        %v1155 = vlaneseq
        %v1156 = vshrl.u32 %v1155, 7
        %v1157 = vsub.s32 %v1154, %v1156
        %v1158 = vrot.slane %v1144, %v1157
        %v1159 = vcombine.low %v1151, %v1158
        %v1160 = vcombine.low %v896, %v900
        %v1161 = vcombine.low %v904, %v908
        %v1163 = vunpack.c.l.s4 1983009808
        %v1164 = vunpack.c.0.s8 %v1163
        %v1165 = vlaneseq
        %v1166 = vshrl.u32 %v1165, 7
        %v1167 = vsub.s32 %v1164, %v1166
        %v1168 = vrot.slane %v1160, %v1167
        %v1170 = vunpack.c.l.s4 1983009808
        %v1171 = vunpack.c.0.s8 %v1170
        %v1172 = vlaneseq
        %v1173 = vshrl.u32 %v1172, 7
        %v1174 = vsub.s32 %v1171, %v1173
        %v1175 = vrot.slane %v1161, %v1174
        %v1176 = vcombine.low %v1168, %v1175
        %v1177 = vcombine.low %v912, %v916
        %v1178 = vcombine.low %v920, %v924
        %v1180 = vunpack.c.l.s4 1983009808
        %v1181 = vunpack.c.0.s8 %v1180
        %v1182 = vlaneseq
        %v1183 = vshrl.u32 %v1182, 7
        %v1184 = vsub.s32 %v1181, %v1183
        %v1185 = vrot.slane %v1177, %v1184
        %v1187 = vunpack.c.l.s4 1983009808
        %v1188 = vunpack.c.0.s8 %v1187
        %v1189 = vlaneseq
        %v1190 = vshrl.u32 %v1189, 7
        %v1191 = vsub.s32 %v1188, %v1190
        %v1192 = vrot.slane %v1178, %v1191
        %v1193 = vcombine.low %v1185, %v1192
        %v1194 = vcombine.low %v928, %v932
        %v1195 = vcombine.low %v936, %v940
        %v1197 = vunpack.c.l.s4 1983009808
        %v1198 = vunpack.c.0.s8 %v1197
        %v1199 = vlaneseq
        %v1200 = vshrl.u32 %v1199, 7
        %v1201 = vsub.s32 %v1198, %v1200
        %v1202 = vrot.slane %v1194, %v1201
        %v1204 = vunpack.c.l.s4 1983009808
        %v1205 = vunpack.c.0.s8 %v1204
        %v1206 = vlaneseq
        %v1207 = vshrl.u32 %v1206, 7
        %v1208 = vsub.s32 %v1205, %v1207
        %v1209 = vrot.slane %v1195, %v1208
        %v1210 = vcombine.low %v1202, %v1209
        %v1211 = vcombine.low %v944, %v948
        %v1212 = vcombine.low %v952, %v956
        %v1214 = vunpack.c.l.s4 1983009808
        %v1215 = vunpack.c.0.s8 %v1214
        %v1216 = vlaneseq
        %v1217 = vshrl.u32 %v1216, 7
        %v1218 = vsub.s32 %v1215, %v1217
        %v1219 = vrot.slane %v1211, %v1218
        %v1221 = vunpack.c.l.s4 1983009808
        %v1222 = vunpack.c.0.s8 %v1221
        %v1223 = vlaneseq
        %v1224 = vshrl.u32 %v1223, 7
        %v1225 = vsub.s32 %v1222, %v1224
        %v1226 = vrot.slane %v1212, %v1225
        %v1227 = vcombine.low %v1219, %v1226
        %v1228 = vcombine.low %v960, %v964
        %v1229 = vcombine.low %v968, %v972
        %v1231 = vunpack.c.l.s4 1983009808
        %v1232 = vunpack.c.0.s8 %v1231
        %v1233 = vlaneseq
        %v1234 = vshrl.u32 %v1233, 7
        %v1235 = vsub.s32 %v1232, %v1234
        %v1236 = vrot.slane %v1228, %v1235
        %v1238 = vunpack.c.l.s4 1983009808
        %v1239 = vunpack.c.0.s8 %v1238
        %v1240 = vlaneseq
        %v1241 = vshrl.u32 %v1240, 7
        %v1242 = vsub.s32 %v1239, %v1241
        %v1243 = vrot.slane %v1229, %v1242
        %v1244 = vcombine.low %v1236, %v1243
        %vm1261 = vcmask 130048
        %1262 = vst.msk [vmem:[%s175] sm:$0xff] %vm1261, %v989
        %1263 = vst.msk [vmem:[%s175 + $0x8] sm:$0xff] %vm1261, %v1006
        %1264 = vst.msk [vmem:[%s175 + $0x10] sm:$0xff] %vm1261, %v989
        %1265 = vst.msk [vmem:[%s175 + $0x18] sm:$0xff] %vm1261, %v1006
        %1266 = vst.msk [vmem:[%s175 + $0x20] sm:$0xff] %vm1261, %v1023
        %1267 = vst.msk [vmem:[%s175 + $0x28] sm:$0xff] %vm1261, %v1040
        %1268 = vst.msk [vmem:[%s175 + $0x30] sm:$0xff] %vm1261, %v1023
        %1269 = vst.msk [vmem:[%s175 + $0x38] sm:$0xff] %vm1261, %v1040
        %1270 = vst.msk [vmem:[%s175 + $0x40] sm:$0xff] %vm1261, %v1057
        %1271 = vst.msk [vmem:[%s175 + $0x48] sm:$0xff] %vm1261, %v1074
        %1272 = vst.msk [vmem:[%s175 + $0x50] sm:$0xff] %vm1261, %v1057
        %1273 = vst.msk [vmem:[%s175 + $0x58] sm:$0xff] %vm1261, %v1074
        %1274 = vst.msk [vmem:[%s175 + $0x60] sm:$0xff] %vm1261, %v1091
        %1275 = vst.msk [vmem:[%s175 + $0x68] sm:$0xff] %vm1261, %v1108
        %1276 = vst.msk [vmem:[%s175 + $0x70] sm:$0xff] %vm1261, %v1091
        %1277 = vst.msk [vmem:[%s175 + $0x78] sm:$0xff] %vm1261, %v1108
        %1278 = vst.msk [vmem:[%s175 + $0x80] sm:$0xff] %vm1261, %v1125
        %1279 = vst.msk [vmem:[%s175 + $0x88] sm:$0xff] %vm1261, %v1142
        %1280 = vst.msk [vmem:[%s175 + $0x90] sm:$0xff] %vm1261, %v1125
        %1281 = vst.msk [vmem:[%s175 + $0x98] sm:$0xff] %vm1261, %v1142
        %1282 = vst.msk [vmem:[%s175 + $0xa0] sm:$0xff] %vm1261, %v1159
        %1283 = vst.msk [vmem:[%s175 + $0xa8] sm:$0xff] %vm1261, %v1176
        %1284 = vst.msk [vmem:[%s175 + $0xb0] sm:$0xff] %vm1261, %v1159
        %1285 = vst.msk [vmem:[%s175 + $0xb8] sm:$0xff] %vm1261, %v1176
        %1286 = vst.msk [vmem:[%s175 + $0xc0] sm:$0xff] %vm1261, %v1193
        %1287 = vst.msk [vmem:[%s175 + $0xc8] sm:$0xff] %vm1261, %v1210
        %1288 = vst.msk [vmem:[%s175 + $0xd0] sm:$0xff] %vm1261, %v1193
        %1289 = vst.msk [vmem:[%s175 + $0xd8] sm:$0xff] %vm1261, %v1210
        %1290 = vst.msk [vmem:[%s175 + $0xe0] sm:$0xff] %vm1261, %v1227
        %1291 = vst.msk [vmem:[%s175 + $0xe8] sm:$0xff] %vm1261, %v1244
        %1292 = vst.msk [vmem:[%s175 + $0xf0] sm:$0xff] %vm1261, %v1227
        %1293 = vst.msk [vmem:[%s175 + $0xf8] sm:$0xff] %vm1261, %v1244
        %s1294 = sand.u32 %s75, 1
        %s1295 = scalar_lea.sflag [#allocation4], %s1294
        %s1296 = sand.u32 %s75, 1
        %s1297 = smul.addr %s1296, 256
        %s1298 = scalar_lea.vmem [#allocation7], %s1297
        // Predicated region
        $region37: #{tpu_custom_call.1} parent=27 // pred_check
          %p1299 = pneg %p85
        $region38: #{tpu_custom_call.1} parent=27 // pred_check_branch
          %1301 = sbr.rel (%p1299) target = $region40
        $region39: #{tpu_custom_call.1} parent=27 // pred_region
          %s1302 = smul.u32 2, %s20
          %s1304 = ssub.s32 4096, 4096
          %1305 = vsyncadd %s1295, %s1304
          %s1306 = smul.addr %s1302, 16
          %s1307 = smul.addr %s1306, 128
          %s1308 = scalar_lea.hbm %s2, %s1307
          %s1309 = sshll.u32 %s1298, 4
          %s1310 = int_to_ptr.vmem [resolvable:$true] %s1309
          %1315 = dma.vmem_to_hbm [thread:$0]  %s1310, 4096, %s1308, %s1295, 128, 128, 8
        $region40: #{tpu_custom_call.1} parent=27 // pred_fallthru
          _
      $region28: #{tpu_custom_call.1} parent=5 // pred_fallthru
        _
      %p1316 = scmp.le.s32.totalorder 2, %s15
      // Predicated region
      $region41: #{tpu_custom_call.1} parent=5 // pred_check
        %p1317 = pneg %p1316
      $region42: #{tpu_custom_call.1} parent=5 // pred_check_branch
        %1319 = sbr.rel (%p1317) target = $region44
      $region43: #{tpu_custom_call.1} parent=5 // pred_region
        %s1320 = ssub.s32 %s15, 2
        // Predicated region
        $region45: #{tpu_custom_call.1} parent=43 // pred_check
          %p1321 = pneg %p91
        $region46: #{tpu_custom_call.1} parent=43 // pred_check_branch
          %1323 = sbr.rel (%p1321) target = $region48
        $region47: #{tpu_custom_call.1} parent=43 // pred_region
          %s1324 = sand.u32 %s76, 1
          %s1325 = scalar_lea.sflag [#allocation4], %s1324
          %s1326 = sand.u32 %s76, 1
          %s1327 = smul.addr %s1326, 256
          %s1328 = scalar_lea.vmem [#allocation7], %s1327
          %1329 = dma.done %s1325, 4096
        $region48: #{tpu_custom_call.1} parent=43 // pred_fallthru
          _
      $region44: #{tpu_custom_call.1} parent=5 // pred_fallthru
        _
    $region6: #{tpu_custom_call.1} parent=1 // loop_footer
      %s19 = sadd.s32 1, %s15
    $region7: #{tpu_custom_call.1} parent=1 // loop_footer_branch
      %14 = sbr.rel target = $region3
    $region8: #{tpu_custom_call.1} parent=1 // loop_exit
      _
    %1330 = vsyncpa [#allocation3], 1
    %s1331 = scalar_lea.sflag [#allocation3], 1
    %1332 = vsyncpa %s1331, 1
    %1333 = vsyncpa [#allocation6], 1
    %1334 = vsyncpa [#allocation4], 1
    %s1335 = scalar_lea.sflag [#allocation4], 1
    %1336 = vsyncpa %s1335, 1

</llo_original>
